<compile_context>
chip_gen: v7x
topology: tpu7x:2x2x1
jax: 0.10.0
libtpu: 0.0.40
codegen_flags: <defaults>
</compile_context>

<pallas_src>
import jax
import jax.numpy as jnp
from jax import lax
from jax.experimental import pallas as pl
from jax.experimental.pallas import tpu as pltpu


def _cln_kernel(eps):
    def kernel(x_ref, gain_ref, bias_ref, inv_cnt_ref, o_ref, carry_ref):
        t_idx = pl.program_id(1)

        # Reset the running (cumulative) sums at the start of each batch row.
        @pl.when(t_idx == 0)
        def _():
            carry_ref[...] = jnp.zeros_like(carry_ref)

        x = x_ref[...].astype(jnp.float32)                 # (1, C, Tb)
        Tb = x.shape[2]

        # Per-time-step channel sums (sum + sum of squares), stacked so ONE
        # scan handles both rows.
        step_sum = jnp.sum(x, axis=1)                      # (1, Tb)
        step_pow_sum = jnp.sum(x * x, axis=1)              # (1, Tb)
        stats = jnp.concatenate([step_sum, step_pow_sum], axis=0)   # (2, Tb)

        # In-block inclusive prefix sum: Hillis–Steele scan with pltpu.roll
        # (XLU) + masked adds (VPU). log2(Tb) steps, exact f32, no MXU, no
        # Tb x Tb constant in VMEM.
        lane_idx = lax.broadcasted_iota(jnp.int32, (2, Tb), 1)
        cum = stats
        shift = 1
        while shift < Tb:
            prev = pltpu.roll(cum, shift, axis=1)          # prev[i] = cum[i - shift]
            cum = cum + jnp.where(lane_idx >= shift, prev, 0.0)
            shift *= 2

        # Add the carried totals from previous time tiles, then update carry
        # with the last lane (already includes this block's total).
        cum = cum + carry_ref[...]                         # (2, Tb)
        carry_ref[...] = cum[:, Tb - 1:Tb]                 # (2, 1)

        inv_cnt = inv_cnt_ref[...]                         # (1, Tb) = 1 / (C * (t+1))
        cum_sum = cum[0:1, :]                              # (1, Tb)
        cum_pow_sum = cum[1:2, :]                          # (1, Tb)

        cum_mean = cum_sum * inv_cnt
        cum_var = (cum_pow_sum - 2.0 * cum_mean * cum_sum) * inv_cnt + cum_mean * cum_mean
        cum_var = jnp.maximum(cum_var, 0.0)                # guard vs. cancellation
        inv_std = lax.rsqrt(cum_var + eps)                 # rsqrt on (1, Tb) only (EUP)

        cum_mean_b = cum_mean.reshape(1, 1, Tb)
        inv_std_b = inv_std.reshape(1, 1, Tb)

        g = gain_ref[...].astype(jnp.float32)              # (1, C, 1), VMEM-resident
        b = bias_ref[...].astype(jnp.float32)              # (1, C, 1)

        y = (x - cum_mean_b) * inv_std_b                   # pure VPU sub/mul
        o_ref[...] = (y * g + b).astype(o_ref.dtype)

    return kernel


def _pick_time_block(t_pad, max_block=2048):
    """Largest multiple of 128 (<= max_block) dividing t_pad (t_pad % 128 == 0)."""
    best = 128
    blk = 128
    while blk <= min(t_pad, max_block):
        if t_pad % blk == 0:
            best = blk
        blk += 128
    return best


def cln_forward(x, gain, bias, eps=1e-8, block_t=None, max_block=2048):
    """x: (B, C, T) f32/bf16, gain/bias: (1, C, 1). Returns (B, C, T) in x.dtype."""
    B, C, T = x.shape

    # Pad T to a multiple of 128 so every tile is lane-dense and pipelined;
    # the cumulative sum is causal, so zero padding never affects t < T.
    T_pad = ((T + 127) // 128) * 128
    if T_pad != T:
        x = jnp.pad(x, ((0, 0), (0, 0), (0, T_pad - T)))

    if block_t is None or block_t % 128 != 0 or T_pad % block_t != 0:
        block_t = _pick_time_block(T_pad, max_block)
    n_t = T_pad // block_t

    # Reciprocal entry counts: 1 / (C * (t + 1)). Padded tail values are unused
    # (the output there is sliced away).
    inv_cnt = (1.0 / (jnp.arange(1, T_pad + 1, dtype=jnp.float32) * float(C))).reshape(1, T_pad)

    # Explicit VMEM budget: double-buffered x/out tiles + small constants,
    # capped so the same config fits v7x's 64 MiB physical VMEM.
    itemsize = jnp.dtype(x.dtype).itemsize
    tile_bytes = C * block_t * itemsize
    vmem_limit = 4 * tile_bytes + 4 * block_t * 4 + 4 * C * itemsize + (4 << 20)
    vmem_limit = int(min(48 << 20, max(vmem_limit, 8 << 20)))

    out = pl.pallas_call(
        _cln_kernel(eps),
        out_shape=jax.ShapeDtypeStruct((B, C, T_pad), x.dtype),
        grid_spec=pltpu.PrefetchScalarGridSpec(
            num_scalar_prefetch=0,
            grid=(B, n_t),
            in_specs=[
                pl.BlockSpec((1, C, block_t), lambda b, t: (b, 0, t)),   # x tile
                pl.BlockSpec((1, C, 1), lambda b, t: (0, 0, 0)),         # gain (resident)
                pl.BlockSpec((1, C, 1), lambda b, t: (0, 0, 0)),         # bias (resident)
                pl.BlockSpec((1, block_t), lambda b, t: (0, t)),         # 1 / entry_cnt
            ],
            out_specs=pl.BlockSpec((1, C, block_t), lambda b, t: (b, 0, t)),
            scratch_shapes=[pltpu.VMEM((2, 1), jnp.float32)],            # carried cumsums
        ),
        compiler_params=pltpu.CompilerParams(
            dimension_semantics=("parallel", "arbitrary"),
            vmem_limit_bytes=vmem_limit,
        ),
    )(x, gain, bias, inv_cnt)

    if T_pad != T:
        out = out[:, :, :T]
    return out


def cln_reference(x, gain, bias, eps=1e-8):
    """Pure-JAX reference mirroring the PyTorch cLN.forward (f32 math)."""
    x = x.astype(jnp.float32)
    B, C, T = x.shape
    step_sum = x.sum(axis=1)                    # (B, T)
    step_pow_sum = (x * x).sum(axis=1)          # (B, T)
    cum_sum = jnp.cumsum(step_sum, axis=1)
    cum_pow_sum = jnp.cumsum(step_pow_sum, axis=1)
    entry_cnt = (jnp.arange(1, T + 1, dtype=jnp.float32) * C)[None, :]
    cum_mean = cum_sum / entry_cnt
    cum_var = (cum_pow_sum - 2 * cum_mean * cum_sum) / entry_cnt + cum_mean ** 2
    cum_std = jnp.sqrt(cum_var + eps)
    y = (x - cum_mean[:, None, :]) / cum_std[:, None, :]
    return y * gain.astype(jnp.float32) + bias.astype(jnp.float32)


if __name__ == "__main__":
    key = jax.random.PRNGKey(0)

    # 1) Shapes consistent with dilate_CNN's cLN usage (128 channels), kept
    #    small. block_t=128 forces 4 time tiles per batch row, exercising the
    #    carried cumulative state and the roll-based in-block scan.
    B, C, T = 2, 128, 512
    kx, kg, kb = jax.random.split(key, 3)
    x = jax.random.normal(kx, (B, C, T), dtype=jnp.float32)
    gain = 1.0 + 0.1 * jax.random.normal(kg, (1, C, 1), dtype=jnp.float32)
    bias = 0.1 * jax.random.normal(kb, (1, C, 1), dtype=jnp.float32)

    out = jax.block_until_ready(cln_forward(x, gain, bias, eps=1e-8, block_t=128))
    ref = cln_reference(x, gain, bias, eps=1e-8)
    assert jnp.allclose(out, ref, atol=1e-4, rtol=1e-4), "mismatch vs reference (tiled)"

    # 2) Tiny shape, T not a multiple of 128 -> padding path, single tile.
    B2, C2, T2 = 2, 4, 16
    x2 = jax.random.normal(jax.random.PRNGKey(1), (B2, C2, T2), dtype=jnp.float32)
    gain2 = jnp.ones((1, C2, 1), dtype=jnp.float32)   # module init: ones / zeros
    bias2 = jnp.zeros((1, C2, 1), dtype=jnp.float32)
    out2 = jax.block_until_ready(cln_forward(x2, gain2, bias2, eps=1e-8))
    ref2 = cln_reference(x2, gain2, bias2, eps=1e-8)
    assert jnp.allclose(out2, ref2, atol=1e-4, rtol=1e-4), "mismatch vs reference (small)"

    # 3) Non-128-multiple T with multiple time tiles: padding + carried state.
    B3, C3, T3 = 2, 8, 300
    x3 = jax.random.normal(jax.random.PRNGKey(2), (B3, C3, T3), dtype=jnp.float32)
    gain3 = jnp.ones((1, C3, 1), dtype=jnp.float32)
    bias3 = jnp.zeros((1, C3, 1), dtype=jnp.float32)
    out3 = jax.block_until_ready(cln_forward(x3, gain3, bias3, eps=1e-8, block_t=128))
    ref3 = cln_reference(x3, gain3, bias3, eps=1e-8)
    assert jnp.allclose(out3, ref3, atol=1e-4, rtol=1e-4), "mismatch vs reference (padded+tiled)"

    # 4) bf16 activations (f32 stats in-kernel, bf16 output) — halves HBM bytes.
    x4 = jax.random.normal(jax.random.PRNGKey(3), (B, C, T), dtype=jnp.float32).astype(jnp.bfloat16)
    out4 = jax.block_until_ready(cln_forward(x4, gain, bias, eps=1e-8, block_t=128))
    ref4 = cln_reference(x4.astype(jnp.float32), gain, bias, eps=1e-8)
    assert out4.dtype == jnp.bfloat16
    assert jnp.allclose(out4.astype(jnp.float32), ref4, atol=5e-2, rtol=5e-2), "mismatch (bf16)"

    print("KERNEL_OK")
</pallas_src>

<mosaic_0001>
module attributes {stable_mosaic.version = 11 : i64} {
  func.func @kernel(%arg0: i32, %arg1: i32, %arg2: memref<1x128x128xf32, #tpu.memory_space<vmem>>, %arg3: memref<1x128x1xf32, #tpu.memory_space<vmem>>, %arg4: memref<1x128x1xf32, #tpu.memory_space<vmem>>, %arg5: memref<1x128xf32, #tpu.memory_space<vmem>>, %arg6: memref<1x128x128xf32, #tpu.memory_space<vmem>>, %arg7: memref<2x1xf32, #tpu.memory_space<vmem>>) attributes {dimension_semantics = [#tpu.dimension_semantics<parallel>, #tpu.dimension_semantics<arbitrary>], iteration_bounds = array<i64: 2, 4>, scalar_prefetch = 0 : i64, scratch_operands = 1 : i64, tpu.core_type = #tpu.core_type<tc>, window_params = [{transform_indices = @transform_0, window_bounds = array<i64: 1, 128, 128>}, {pipeline_mode = #tpu.pipeline_mode<synchronous>, transform_indices = @transform_1, window_bounds = array<i64: 1, 128, 1>}, {pipeline_mode = #tpu.pipeline_mode<synchronous>, transform_indices = @transform_2, window_bounds = array<i64: 1, 128, 1>}, {transform_indices = @transform_3, window_bounds = array<i64: 1, 128>}, {transform_indices = @transform_4, window_bounds = array<i64: 1, 128, 128>}]} {
    %c0_i32 = arith.constant 0 : i32
    %0 = arith.cmpi eq, %arg1, %c0_i32 : i32
    %1 = arith.extui %0 : i1 to i32
    %c0_i32_0 = arith.constant 0 : i32
    %2 = arith.cmpi ne, %1, %c0_i32_0 : i32
    scf.if %2 {
      %cst_36 = arith.constant 0.000000e+00 : f32
      %85 = vector.broadcast %cst_36 : f32 to vector<2x1xf32>
      %c0_37 = arith.constant 0 : index
      %c0_38 = arith.constant 0 : index
      %86 = vector.load %arg7[%c0_37, %c0_38] : memref<2x1xf32, #tpu.memory_space<vmem>>, vector<2x1xf32>
      tpu.vector_store %arg7[%c0_37, %c0_38], %85 {strides = array<i32>} : memref<2x1xf32, #tpu.memory_space<vmem>>, vector<2x1xf32>,
    } else {
    }
    %c0 = arith.constant 0 : index
    %c0_1 = arith.constant 0 : index
    %c0_2 = arith.constant 0 : index
    %3 = vector.load %arg2[%c0, %c0_1, %c0_2] : memref<1x128x128xf32, #tpu.memory_space<vmem>>, vector<1x128x128xf32>
    %cst = arith.constant dense<0.000000e+00> : vector<1x128xf32>
    %4 = vector.multi_reduction <add>, %3, %cst [1] : vector<1x128x128xf32> to vector<1x128xf32>
    %5 = arith.mulf %3, %3 : vector<1x128x128xf32>
    %cst_3 = arith.constant dense<0.000000e+00> : vector<1x128xf32>
    %6 = vector.multi_reduction <add>, %5, %cst_3 [1] : vector<1x128x128xf32> to vector<1x128xf32>
    %7 = tpu.concatenate %4, %6 in 0 : vector<1x128xf32>, vector<1x128xf32> -> vector<2x128xf32>
    %8 = tpu.iota {dimensions = array<i32: 1>} : vector<2x128xi32>
    %c1_i32 = arith.constant 1 : i32
    %9 = tpu.dynamic_rotate %7 by %c1_i32 dim 1 : vector<2x128xf32>, i32 -> vector<2x128xf32>
    %c1_i32_4 = arith.constant 1 : i32
    %10 = vector.broadcast %c1_i32_4 : i32 to vector<2x128xi32>
    %11 = arith.cmpi sge, %8, %10 : vector<2x128xi32>
    %cst_5 = arith.constant 0.000000e+00 : f32
    %12 = vector.broadcast %cst_5 : f32 to vector<2x128xf32>
    %13 = arith.select %11, %9, %12 : vector<2x128xi1>, vector<2x128xf32>
    %14 = arith.addf %7, %13 : vector<2x128xf32>
    %c2_i32 = arith.constant 2 : i32
    %15 = tpu.dynamic_rotate %14 by %c2_i32 dim 1 : vector<2x128xf32>, i32 -> vector<2x128xf32>
    %c2_i32_6 = arith.constant 2 : i32
    %16 = vector.broadcast %c2_i32_6 : i32 to vector<2x128xi32>
    %17 = arith.cmpi sge, %8, %16 : vector<2x128xi32>
    %cst_7 = arith.constant 0.000000e+00 : f32
    %18 = vector.broadcast %cst_7 : f32 to vector<2x128xf32>
    %19 = arith.select %17, %15, %18 : vector<2x128xi1>, vector<2x128xf32>
    %20 = arith.addf %14, %19 : vector<2x128xf32>
    %c4_i32 = arith.constant 4 : i32
    %21 = tpu.dynamic_rotate %20 by %c4_i32 dim 1 : vector<2x128xf32>, i32 -> vector<2x128xf32>
    %c4_i32_8 = arith.constant 4 : i32
    %22 = vector.broadcast %c4_i32_8 : i32 to vector<2x128xi32>
    %23 = arith.cmpi sge, %8, %22 : vector<2x128xi32>
    %cst_9 = arith.constant 0.000000e+00 : f32
    %24 = vector.broadcast %cst_9 : f32 to vector<2x128xf32>
    %25 = arith.select %23, %21, %24 : vector<2x128xi1>, vector<2x128xf32>
    %26 = arith.addf %20, %25 : vector<2x128xf32>
    %c8_i32 = arith.constant 8 : i32
    %27 = tpu.dynamic_rotate %26 by %c8_i32 dim 1 : vector<2x128xf32>, i32 -> vector<2x128xf32>
    %c8_i32_10 = arith.constant 8 : i32
    %28 = vector.broadcast %c8_i32_10 : i32 to vector<2x128xi32>
    %29 = arith.cmpi sge, %8, %28 : vector<2x128xi32>
    %cst_11 = arith.constant 0.000000e+00 : f32
    %30 = vector.broadcast %cst_11 : f32 to vector<2x128xf32>
    %31 = arith.select %29, %27, %30 : vector<2x128xi1>, vector<2x128xf32>
    %32 = arith.addf %26, %31 : vector<2x128xf32>
    %c16_i32 = arith.constant 16 : i32
    %33 = tpu.dynamic_rotate %32 by %c16_i32 dim 1 : vector<2x128xf32>, i32 -> vector<2x128xf32>
    %c16_i32_12 = arith.constant 16 : i32
    %34 = vector.broadcast %c16_i32_12 : i32 to vector<2x128xi32>
    %35 = arith.cmpi sge, %8, %34 : vector<2x128xi32>
    %cst_13 = arith.constant 0.000000e+00 : f32
    %36 = vector.broadcast %cst_13 : f32 to vector<2x128xf32>
    %37 = arith.select %35, %33, %36 : vector<2x128xi1>, vector<2x128xf32>
    %38 = arith.addf %32, %37 : vector<2x128xf32>
    %c32_i32 = arith.constant 32 : i32
    %39 = tpu.dynamic_rotate %38 by %c32_i32 dim 1 : vector<2x128xf32>, i32 -> vector<2x128xf32>
    %c32_i32_14 = arith.constant 32 : i32
    %40 = vector.broadcast %c32_i32_14 : i32 to vector<2x128xi32>
    %41 = arith.cmpi sge, %8, %40 : vector<2x128xi32>
    %cst_15 = arith.constant 0.000000e+00 : f32
    %42 = vector.broadcast %cst_15 : f32 to vector<2x128xf32>
    %43 = arith.select %41, %39, %42 : vector<2x128xi1>, vector<2x128xf32>
    %44 = arith.addf %38, %43 : vector<2x128xf32>
    %c64_i32 = arith.constant 64 : i32
    %45 = tpu.dynamic_rotate %44 by %c64_i32 dim 1 : vector<2x128xf32>, i32 -> vector<2x128xf32>
    %c64_i32_16 = arith.constant 64 : i32
    %46 = vector.broadcast %c64_i32_16 : i32 to vector<2x128xi32>
    %47 = arith.cmpi sge, %8, %46 : vector<2x128xi32>
    %cst_17 = arith.constant 0.000000e+00 : f32
    %48 = vector.broadcast %cst_17 : f32 to vector<2x128xf32>
    %49 = arith.select %47, %45, %48 : vector<2x128xi1>, vector<2x128xf32>
    %50 = arith.addf %44, %49 : vector<2x128xf32>
    %c0_18 = arith.constant 0 : index
    %c0_19 = arith.constant 0 : index
    %51 = vector.load %arg7[%c0_18, %c0_19] : memref<2x1xf32, #tpu.memory_space<vmem>>, vector<2x1xf32>
    %52 = vector.broadcast %51 : vector<2x1xf32> to vector<2x128xf32>
    %53 = arith.addf %50, %52 : vector<2x128xf32>
    %54 = vector.extract_strided_slice %53 {offsets = [0, 127], sizes = [2, 1], strides = [1, 1]} : vector<2x128xf32> to vector<2x1xf32>
    %c0_20 = arith.constant 0 : index
    %c0_21 = arith.constant 0 : index
    %55 = vector.load %arg7[%c0_20, %c0_21] : memref<2x1xf32, #tpu.memory_space<vmem>>, vector<2x1xf32>
    tpu.vector_store %arg7[%c0_20, %c0_21], %54 {strides = array<i32>} : memref<2x1xf32, #tpu.memory_space<vmem>>, vector<2x1xf32>,
    %c0_22 = arith.constant 0 : index
    %c0_23 = arith.constant 0 : index
    %56 = vector.load %arg5[%c0_22, %c0_23] : memref<1x128xf32, #tpu.memory_space<vmem>>, vector<1x128xf32>
    %57 = vector.extract_strided_slice %53 {offsets = [0, 0], sizes = [1, 128], strides = [1, 1]} : vector<2x128xf32> to vector<1x128xf32>
    %58 = vector.extract_strided_slice %53 {offsets = [1, 0], sizes = [1, 128], strides = [1, 1]} : vector<2x128xf32> to vector<1x128xf32>
    %59 = arith.mulf %57, %56 : vector<1x128xf32>
    %cst_24 = arith.constant 2.000000e+00 : f32
    %60 = vector.broadcast %cst_24 : f32 to vector<1x128xf32>
    %61 = arith.mulf %60, %59 : vector<1x128xf32>
    %62 = arith.mulf %61, %57 : vector<1x128xf32>
    %63 = arith.subf %58, %62 : vector<1x128xf32>
    %64 = arith.mulf %63, %56 : vector<1x128xf32>
    %65 = arith.mulf %59, %59 : vector<1x128xf32>
    %66 = arith.addf %64, %65 : vector<1x128xf32>
    %cst_25 = arith.constant 0.000000e+00 : f32
    %67 = vector.broadcast %cst_25 : f32 to vector<1x128xf32>
    %68 = arith.maximumf %66, %67 : vector<1x128xf32>
    %cst_26 = arith.constant 9.99999993E-9 : f32
    %69 = vector.broadcast %cst_26 : f32 to vector<1x128xf32>
    %70 = arith.addf %68, %69 : vector<1x128xf32>
    %71 = math.rsqrt %70 : vector<1x128xf32>
    %72 = vector.shape_cast %59 : vector<1x128xf32> to vector<1x1x128xf32>
    %73 = vector.shape_cast %71 : vector<1x128xf32> to vector<1x1x128xf32>
    %c0_27 = arith.constant 0 : index
    %c0_28 = arith.constant 0 : index
    %c0_29 = arith.constant 0 : index
    %74 = vector.load %arg3[%c0_27, %c0_28, %c0_29] : memref<1x128x1xf32, #tpu.memory_space<vmem>>, vector<1x128x1xf32>
    %c0_30 = arith.constant 0 : index
    %c0_31 = arith.constant 0 : index
    %c0_32 = arith.constant 0 : index
    %75 = vector.load %arg4[%c0_30, %c0_31, %c0_32] : memref<1x128x1xf32, #tpu.memory_space<vmem>>, vector<1x128x1xf32>
    %76 = vector.broadcast %72 : vector<1x1x128xf32> to vector<1x128x128xf32>
    %77 = arith.subf %3, %76 : vector<1x128x128xf32>
    %78 = vector.broadcast %73 : vector<1x1x128xf32> to vector<1x128x128xf32>
    %79 = arith.mulf %77, %78 : vector<1x128x128xf32>
    %80 = vector.broadcast %74 : vector<1x128x1xf32> to vector<1x128x128xf32>
    %81 = arith.mulf %79, %80 : vector<1x128x128xf32>
    %82 = vector.broadcast %75 : vector<1x128x1xf32> to vector<1x128x128xf32>
    %83 = arith.addf %81, %82 : vector<1x128x128xf32>
    %c0_33 = arith.constant 0 : index
    %c0_34 = arith.constant 0 : index
    %c0_35 = arith.constant 0 : index
    %84 = vector.load %arg6[%c0_33, %c0_34, %c0_35] : memref<1x128x128xf32, #tpu.memory_space<vmem>>, vector<1x128x128xf32>
    tpu.vector_store %arg6[%c0_33, %c0_34, %c0_35], %83 {strides = array<i32>} : memref<1x128x128xf32, #tpu.memory_space<vmem>>, vector<1x128x128xf32>,
    return
  }
  func.func @transform_0(%arg0: i32, %arg1: i32) -> (i32, i32, i32) {
    %c0_i32 = arith.constant 0 : i32
    %c0_i32_0 = arith.constant 0 : i32
    return %arg0, %c0_i32, %arg1 : i32, i32, i32
  }
  func.func @transform_1(%arg0: i32, %arg1: i32) -> (i32, i32, i32) {
    %c0_i32 = arith.constant 0 : i32
    %c0_i32_0 = arith.constant 0 : i32
    %c0_i32_1 = arith.constant 0 : i32
    %c0_i32_2 = arith.constant 0 : i32
    return %c0_i32, %c0_i32_0, %c0_i32_1 : i32, i32, i32
  }
  func.func @transform_2(%arg0: i32, %arg1: i32) -> (i32, i32, i32) {
    %c0_i32 = arith.constant 0 : i32
    %c0_i32_0 = arith.constant 0 : i32
    %c0_i32_1 = arith.constant 0 : i32
    %c0_i32_2 = arith.constant 0 : i32
    return %c0_i32, %c0_i32_0, %c0_i32_1 : i32, i32, i32
  }
  func.func @transform_3(%arg0: i32, %arg1: i32) -> (i32, i32) {
    %c0_i32 = arith.constant 0 : i32
    %c0_i32_0 = arith.constant 0 : i32
    return %c0_i32, %arg1 : i32, i32
  }
  func.func @transform_4(%arg0: i32, %arg1: i32) -> (i32, i32, i32) {
    %c0_i32 = arith.constant 0 : i32
    %c0_i32_0 = arith.constant 0 : i32
    return %arg0, %c0_i32, %arg1 : i32, i32, i32
  }
}

</mosaic_0001>

<llo_original>
// kernel: tpu_custom_call.1
$region0: #{tpu_custom_call.1}
  #allocation0 [shape = 'u32[]', space=smem, size = 0x4, offset = 0x4, fixed_abs, tag = 'smem constant byte address 0x4 - core index']
  #allocation1 [shape = 'u32[144,128]{1,0:T(1,128)}', space=vmem, size = 0x12000, scoped, tag = 'internal scratch']
  #allocation2 [shape = 'f32[2,1]{1,0:T(2,128)}', space=vmem, size = 0x400, scoped, tag = 'scratch operand']
  %s0 = inlined_call_operand.hbm [shape: f32[2,128,512], index: 0, kind: input, shape index: {}]
  %s1 = inlined_call_operand.vmem [shape: f32[1,128,1], index: 1, kind: input, shape index: {}]
  %s2 = inlined_call_operand.vmem [shape: f32[1,128,1], index: 2, kind: input, shape index: {}]
  %s3 = inlined_call_operand.vmem [shape: f32[1,512], index: 3, kind: input, shape index: {}]
  %s4 = inlined_call_operand.hbm [shape: f32[2,128,512], index: 4, kind: output, shape index: {}]
  %s5 = sld [smem:[#allocation0]]
  $region57: #{tpu_custom_call.1} parent=0
    _
  %s7 = ssub.s32 1, %s5
  %s8 = scalar_select 0, %s7, %s5
  $region1: #{tpu_custom_call.1} parent=0
    #allocation3 [shape = 'u8[131072]{0}', space=vmem, size = 0x20000, scoped, tag = 'input window, operand 0']
    #allocation4 [shape = 's32[2]{0}', space=sflag, size = 0x8, scoped, tag = 'scoped memory for tpu_custom_call.1']
    #allocation5 [shape = 's32[2]{0}', space=sflag, size = 0x8, scoped, tag = 'scoped memory for tpu_custom_call.1']
    #allocation6 [shape = 'u8[131072]{0}', space=vmem, size = 0x20000, scoped, tag = 'output window, operand 0']
    %9 = vsyncpa [#allocation4], 0
    %s10 = scalar_lea.sflag [#allocation4], 1
    %11 = vsyncpa %s10, 0
    %12 = vsyncpa [#allocation5], 0
    %s13 = scalar_lea.sflag [#allocation5], 1
    %14 = vsyncpa %s13, 0
    loop: start=0, step=1, limit=10
    $region2: #{tpu_custom_call.1} parent=1 // loop_pre_header
      _
    $region3: #{tpu_custom_call.1} parent=1 // loop_header
      %s16 = sphi 0, %s20
      %p17 = scmp.ge.s32.totalorder %s16, 10
      %s23 = sphi 0, %s35
      %s24 = sphi 0, %s31
      %s25 = sphi 0, %s23
      %s26 = sphi 0, %s24
      %s27 = sphi 0, %s25
      %s28 = sphi 0, %s26
      %s40 = sphi 0, %s42
      %s43 = sphi 0, %s40
      %s44 = sphi 0, %s43
      %s60 = sphi 0, %s44
      %s64 = sphi 0, %s64
      %s66 = sphi 0, %s64
      %s67 = sphi 0, %s66
      %s81 = sphi 0, %s67
      %s85 = sphi 0, %s85
      %s87 = sphi 0, %s85
      %s88 = sphi 0, %s87
      %s102 = sphi 0, %s88
      %s108 = sphi 0, %s110
      %s111 = sphi 0, %s108
      %s112 = sphi 0, %s111
      %s128 = sphi 0, %s112
      %s136 = sphi 0, %s138
      %s139 = sphi 0, %s136
      %s140 = sphi 0, %s139
      %s156 = sphi 0, %s140
    $region4: #{tpu_custom_call.1} parent=1 // loop_header_branch
      %19 = sbr.rel (%p17) target = $region8
    $region5: #{tpu_custom_call.1} parent=1 // loop_body
      %s21 = ssub.s32 %s16, 1
      %s22 = ssub.s32 %s16, 2
      %s29 = sadd.s32 1, %s24
      %p30 = scmp.ge.s32.totalorder %s29, 4
      %s31 = scalar_select %p30, 0, %s29
      %s32 = sadd.s32 1, %s23
      %s33 = scalar_select %p30, %s32, %s23
      %p34 = scmp.ge.s32.totalorder %s33, 2
      %s35 = scalar_select %p34, 0, %s33
      %s36 = ssub.s32 %s23, %s35
      %s37 = ssub.s32 %s24, %s31
      %s38 = sor.u32 %s36, %s37
      %p39 = scmp.eq.s32.totalorder %s38, 0
      %s41 = sadd.s32 %s40, 1
      %s42 = scalar_select %p39, %s40, %s41
      %p45 = pneg %p39
      %p46 = scmp.eq.s32.totalorder %s16, 7
      %p47 = por %p45, %p46
      %p48 = scmp.ne.s32.totalorder %s40, %s43
      %p49 = scmp.eq.s32.totalorder %s16, 0
      %p50 = por %p48, %p49
      %p51 = scmp.ne.s32.totalorder %s40, %s43
      %p52 = scmp.eq.s32.totalorder %s21, 7
      %p53 = por %p51, %p52
      %p54 = scmp.ne.s32.totalorder %s43, %s44
      %p55 = scmp.eq.s32.totalorder %s21, 0
      %p56 = por %p54, %p55
      %p57 = scmp.ne.s32.totalorder %s43, %s44
      %p58 = scmp.eq.s32.totalorder %s22, 7
      %p59 = por %p57, %p58
      %p61 = scmp.ne.s32.totalorder %s44, %s60
      %p62 = scmp.eq.s32.totalorder %s22, 0
      %p63 = por %p61, %p62
      %s65 = sadd.s32 %s64, 1
      %p68 = scmp.eq.s32.totalorder %s16, 7
      %p69 = scmp.ne.s32.totalorder %s64, %s66
      %p70 = scmp.eq.s32.totalorder %s16, 0
      %p71 = por %p69, %p70
      %p72 = scmp.ne.s32.totalorder %s64, %s66
      %p73 = scmp.eq.s32.totalorder %s21, 7
      %p74 = por %p72, %p73
      %p75 = scmp.ne.s32.totalorder %s66, %s67
      %p76 = scmp.eq.s32.totalorder %s21, 0
      %p77 = por %p75, %p76
      %p78 = scmp.ne.s32.totalorder %s66, %s67
      %p79 = scmp.eq.s32.totalorder %s22, 7
      %p80 = por %p78, %p79
      %p82 = scmp.ne.s32.totalorder %s67, %s81
      %p83 = scmp.eq.s32.totalorder %s22, 0
      %p84 = por %p82, %p83
      %s86 = sadd.s32 %s85, 1
      %p89 = scmp.eq.s32.totalorder %s16, 7
      %p90 = scmp.ne.s32.totalorder %s85, %s87
      %p91 = scmp.eq.s32.totalorder %s16, 0
      %p92 = por %p90, %p91
      %p93 = scmp.ne.s32.totalorder %s85, %s87
      %p94 = scmp.eq.s32.totalorder %s21, 7
      %p95 = por %p93, %p94
      %p96 = scmp.ne.s32.totalorder %s87, %s88
      %p97 = scmp.eq.s32.totalorder %s21, 0
      %p98 = por %p96, %p97
      %p99 = scmp.ne.s32.totalorder %s87, %s88
      %p100 = scmp.eq.s32.totalorder %s22, 7
      %p101 = por %p99, %p100
      %p103 = scmp.ne.s32.totalorder %s88, %s102
      %p104 = scmp.eq.s32.totalorder %s22, 0
      %p105 = por %p103, %p104
      %s106 = ssub.s32 %s24, %s31
      %p107 = scmp.eq.s32.totalorder %s106, 0
      %s109 = sadd.s32 %s108, 1
      %s110 = scalar_select %p107, %s108, %s109
      %p113 = pneg %p107
      %p114 = scmp.eq.s32.totalorder %s16, 7
      %p115 = por %p113, %p114
      %p116 = scmp.ne.s32.totalorder %s108, %s111
      %p117 = scmp.eq.s32.totalorder %s16, 0
      %p118 = por %p116, %p117
      %p119 = scmp.ne.s32.totalorder %s108, %s111
      %p120 = scmp.eq.s32.totalorder %s21, 7
      %p121 = por %p119, %p120
      %p122 = scmp.ne.s32.totalorder %s111, %s112
      %p123 = scmp.eq.s32.totalorder %s21, 0
      %p124 = por %p122, %p123
      %p125 = scmp.ne.s32.totalorder %s111, %s112
      %p126 = scmp.eq.s32.totalorder %s22, 7
      %p127 = por %p125, %p126
      %p129 = scmp.ne.s32.totalorder %s112, %s128
      %p130 = scmp.eq.s32.totalorder %s22, 0
      %p131 = por %p129, %p130
      %s132 = ssub.s32 %s23, %s35
      %s133 = ssub.s32 %s24, %s31
      %s134 = sor.u32 %s132, %s133
      %p135 = scmp.eq.s32.totalorder %s134, 0
      %s137 = sadd.s32 %s136, 1
      %s138 = scalar_select %p135, %s136, %s137
      %p141 = pneg %p135
      %p142 = scmp.eq.s32.totalorder %s16, 7
      %p143 = por %p141, %p142
      %p144 = scmp.ne.s32.totalorder %s136, %s139
      %p145 = scmp.eq.s32.totalorder %s16, 0
      %p146 = por %p144, %p145
      %p147 = scmp.ne.s32.totalorder %s136, %s139
      %p148 = scmp.eq.s32.totalorder %s21, 7
      %p149 = por %p147, %p148
      %p150 = scmp.ne.s32.totalorder %s139, %s140
      %p151 = scmp.eq.s32.totalorder %s21, 0
      %p152 = por %p150, %p151
      %p153 = scmp.ne.s32.totalorder %s139, %s140
      %p154 = scmp.eq.s32.totalorder %s22, 7
      %p155 = por %p153, %p154
      %p157 = scmp.ne.s32.totalorder %s140, %s156
      %p158 = scmp.eq.s32.totalorder %s22, 0
      %p159 = por %p157, %p158
      %p160 = scmp.le.s32.totalorder 1, %s16
      %p161 = scmp.lt.s32.totalorder %s16, 9
      %p162 = pnand %p160, %p161
      %p163 = pneg %p162
      // Predicated region
      $region9: #{tpu_custom_call.1} parent=5 // pred_check
        _
      $region10: #{tpu_custom_call.1} parent=5 // pred_check_branch
        %165 = sbr.rel (%p162) target = $region12
      $region11: #{tpu_custom_call.1} parent=5 // pred_region
        %s166 = ssub.s32 %s16, 1
        // Predicated region
        $region13: #{tpu_custom_call.1} parent=11 // pred_check
          %p167 = pneg %p77
        $region14: #{tpu_custom_call.1} parent=11 // pred_check_branch
          %169 = sbr.rel (%p167) target = $region16
        $region15: #{tpu_custom_call.1} parent=11 // pred_region
          _
        $region16: #{tpu_custom_call.1} parent=11 // pred_fallthru
          _
        // Predicated region
        $region17: #{tpu_custom_call.1} parent=11 // pred_check
          %p170 = pneg %p98
        $region18: #{tpu_custom_call.1} parent=11 // pred_check_branch
          %172 = sbr.rel (%p170) target = $region20
        $region19: #{tpu_custom_call.1} parent=11 // pred_region
          _
        $region20: #{tpu_custom_call.1} parent=11 // pred_fallthru
          _
      $region12: #{tpu_custom_call.1} parent=5 // pred_fallthru
        _
      %p173 = scmp.lt.s32.totalorder %s16, 8
      // Predicated region
      $region21: #{tpu_custom_call.1} parent=5 // pred_check
        %p174 = pneg %p173
      $region22: #{tpu_custom_call.1} parent=5 // pred_check_branch
        %176 = sbr.rel (%p174) target = $region24
      $region23: #{tpu_custom_call.1} parent=5 // pred_region
        // Predicated region
        $region25: #{tpu_custom_call.1} parent=23 // pred_check
          %p177 = pneg %p50
        $region26: #{tpu_custom_call.1} parent=23 // pred_check_branch
          %179 = sbr.rel (%p177) target = $region28
        $region27: #{tpu_custom_call.1} parent=23 // pred_region
          %s180 = sand.u32 %s40, 1
          %s181 = scalar_lea.sflag [#allocation4], %s180
          %s182 = sand.u32 %s40, 1
          %s183 = smul.addr %s182, 128
          %s184 = scalar_lea.vmem [#allocation3], %s183
          %s186 = ssub.s32 2048, 2048
          %187 = vsyncadd %s181, %s186
          %s188 = smul.addr %s23, 64
          %s189 = sadd.s32 %s24, %s188
          %s190 = smul.addr %s189, 128
          %s191 = scalar_lea.hbm %s0, %s190
          %s192 = sshll.u32 %s184, 4
          %s193 = int_to_ptr.vmem [resolvable:$true] %s192
          %198 = dma.hbm_to_vmem [thread:$0]  %s191, 2048, %s193, %s181, 512, 128, 8
        $region28: #{tpu_custom_call.1} parent=23 // pred_fallthru
          _
        // Predicated region
        $region29: #{tpu_custom_call.1} parent=23 // pred_check
          %p199 = pneg %p118
        $region30: #{tpu_custom_call.1} parent=23 // pred_check_branch
          %201 = sbr.rel (%p199) target = $region32
        $region31: #{tpu_custom_call.1} parent=23 // pred_region
          %p202 = scmp.lt.s32.totalorder %s24, 3
          %s203 = scalar_select %p202, %s24, 3
          %s204 = scalar_lea.vmem %s3, %s203
        $region32: #{tpu_custom_call.1} parent=23 // pred_fallthru
          _
      $region24: #{tpu_custom_call.1} parent=5 // pred_fallthru
        _
      %p205 = scmp.le.s32.totalorder 1, %s16
      %p206 = scmp.lt.s32.totalorder %s16, 9
      %p207 = pnand %p205, %p206
      %p208 = pneg %p207
      // Predicated region
      $region33: #{tpu_custom_call.1} parent=5 // pred_check
        _
      $region34: #{tpu_custom_call.1} parent=5 // pred_check_branch
        %210 = sbr.rel (%p207) target = $region36
      $region35: #{tpu_custom_call.1} parent=5 // pred_region
        %s211 = ssub.s32 %s16, 1
        %s212 = sand.u32 %s43, 1
        %s213 = scalar_lea.sflag [#allocation4], %s212
        %s214 = sand.u32 %s43, 1
        %s215 = smul.addr %s214, 128
        %s216 = scalar_lea.vmem [#allocation3], %s215
        // Predicated region
        $region37: #{tpu_custom_call.1} parent=35 // pred_check
          %p217 = pneg %p56
        $region38: #{tpu_custom_call.1} parent=35 // pred_check_branch
          %219 = sbr.rel (%p217) target = $region40
        $region39: #{tpu_custom_call.1} parent=35 // pred_region
          %220 = dma.done %s213, 2048
        $region40: #{tpu_custom_call.1} parent=35 // pred_fallthru
          _
        %s221 = sand.u32 %s43, 1
        %s222 = scalar_lea.sflag [#allocation4], %s221
        %s223 = sand.u32 %s43, 1
        %s224 = smul.addr %s223, 128
        %s225 = scalar_lea.vmem [#allocation3], %s224
        %p226 = pneg %p56
        %p227 = pneg %p53
        %p228 = pneg %p77
        %p229 = pneg %p74
        %p230 = pneg %p98
        %p231 = pneg %p95
        %p232 = scmp.lt.s32.totalorder %s26, 3
        %s233 = scalar_select %p232, %s26, 3
        %s234 = scalar_lea.vmem %s3, %s233
        %p235 = pneg %p124
        %p236 = pneg %p121
        %p237 = pneg %p152
        %p238 = pneg %p149
        %s239 = sand.u32 %s139, 1
        %s240 = scalar_lea.sflag [#allocation5], %s239
        %s241 = sand.u32 %s139, 1
        %s242 = smul.addr %s241, 128
        %s243 = scalar_lea.vmem [#allocation6], %s242
        %p244 = scmp.lt.s32.totalorder %s26, 3
        %s245 = scalar_select %p244, %s26, 3
        %s246 = scalar_lea.vmem %s3, %s245
        %p247 = scmp.eq.s32.totalorder %s26, 0
        // Predicated region
        $region41: #{tpu_custom_call.1} parent=35 // pred_check
          %p248 = pneg %p247
        $region42: #{tpu_custom_call.1} parent=35 // pred_check_branch
          %250 = sbr.rel (%p248) target = $region44
        $region43: #{tpu_custom_call.1} parent=35 // pred_region
          %vm251 = vcmask 1024
          %252 = vst.msk [vmem:[#allocation2] sm:$0x3] %vm251, 0.0
        $region44: #{tpu_custom_call.1} parent=35 // pred_fallthru
          _
        %v253 = vld [vmem:[%s216] sm:$0xff]
        %v254 = vld [vmem:[%s216 + $0x8] sm:$0xff]
        %v255 = vld [vmem:[%s216 + $0x10] sm:$0xff]
        %v256 = vld [vmem:[%s216 + $0x18] sm:$0xff]
        %v257 = vld [vmem:[%s216 + $0x20] sm:$0xff]
        %v258 = vld [vmem:[%s216 + $0x28] sm:$0xff]
        %v259 = vld [vmem:[%s216 + $0x30] sm:$0xff]
        %v260 = vld [vmem:[%s216 + $0x38] sm:$0xff]
        %v261 = vld [vmem:[%s216 + $0x40] sm:$0xff]
        %v262 = vld [vmem:[%s216 + $0x48] sm:$0xff]
        %v263 = vld [vmem:[%s216 + $0x50] sm:$0xff]
        %v264 = vld [vmem:[%s216 + $0x58] sm:$0xff]
        %v265 = vld [vmem:[%s216 + $0x60] sm:$0xff]
        %v266 = vld [vmem:[%s216 + $0x68] sm:$0xff]
        %v267 = vld [vmem:[%s216 + $0x70] sm:$0xff]
        %v268 = vld [vmem:[%s216 + $0x78] sm:$0xff]
        %v269 = vadd.f32 %v253, %v254
        %v270 = vadd.f32 %v269, %v255
        %v271 = vadd.f32 %v270, %v256
        %v272 = vadd.f32 %v271, %v257
        %v273 = vadd.f32 %v272, %v258
        %v274 = vadd.f32 %v273, %v259
        %v275 = vadd.f32 %v274, %v260
        %v276 = vadd.f32 %v275, %v261
        %v277 = vadd.f32 %v276, %v262
        %v278 = vadd.f32 %v277, %v263
        %v279 = vadd.f32 %v278, %v264
        %v280 = vadd.f32 %v279, %v265
        %v281 = vadd.f32 %v280, %v266
        %v282 = vadd.f32 %v281, %v267
        %v283 = vadd.f32 %v282, %v268
        %v284 = vrot.slane %v283, 4
        %v285 = vadd.f32 %v283, %v284
        %v286 = vrot.slane %v285, 2
        %v287 = vadd.f32 %v285, %v286
        %v288 = vrot.slane %v287, 1
        %v289 = vadd.f32 %v287, %v288
        %v290 = vmul.f32 %v253, %v253
        %v291 = vmul.f32 %v254, %v254
        %v292 = vmul.f32 %v255, %v255
        %v293 = vmul.f32 %v256, %v256
        %v294 = vmul.f32 %v257, %v257
        %v295 = vmul.f32 %v258, %v258
        %v296 = vmul.f32 %v259, %v259
        %v297 = vmul.f32 %v260, %v260
        %v298 = vmul.f32 %v261, %v261
        %v299 = vmul.f32 %v262, %v262
        %v300 = vmul.f32 %v263, %v263
        %v301 = vmul.f32 %v264, %v264
        %v302 = vmul.f32 %v265, %v265
        %v303 = vmul.f32 %v266, %v266
        %v304 = vmul.f32 %v267, %v267
        %v305 = vmul.f32 %v268, %v268
        %v306 = vadd.f32 %v290, %v291
        %v307 = vadd.f32 %v306, %v292
        %v308 = vadd.f32 %v307, %v293
        %v309 = vadd.f32 %v308, %v294
        %v310 = vadd.f32 %v309, %v295
        %v311 = vadd.f32 %v310, %v296
        %v312 = vadd.f32 %v311, %v297
        %v313 = vadd.f32 %v312, %v298
        %v314 = vadd.f32 %v313, %v299
        %v315 = vadd.f32 %v314, %v300
        %v316 = vadd.f32 %v315, %v301
        %v317 = vadd.f32 %v316, %v302
        %v318 = vadd.f32 %v317, %v303
        %v319 = vadd.f32 %v318, %v304
        %v320 = vadd.f32 %v319, %v305
        %v321 = vrot.slane %v320, 4
        %v322 = vadd.f32 %v320, %v321
        %v323 = vrot.slane %v322, 2
        %v324 = vadd.f32 %v322, %v323
        %v325 = vrot.slane %v324, 1
        %v326 = vadd.f32 %v324, %v325
        %vm327 = vcmask 1040384
        %v328 = vsel %vm327, %v289, %v326
        %v329 = vlaneseq
        %v330 = vand.u32 %v329, 127
        %331 = vrot.lane.b32.xlu0 %v328, 1
        %v332 = vpop.permute.xlu0 %331
        %vm333 = vcmp.ge.s32.totalorder %v330, 1
        %v334 = vsel %vm333, %v332, 0.0
        %v335 = vadd.f32 %v328, %v334
        %336 = vrot.lane.b32.xlu0 %v335, 2
        %v337 = vpop.permute.xlu0 %336
        %vm338 = vcmp.ge.s32.totalorder %v330, 2
        %v339 = vsel %vm338, %v337, 0.0
        %v340 = vadd.f32 %v335, %v339
        %341 = vrot.lane.b32.xlu0 %v340, 4
        %v342 = vpop.permute.xlu0 %341
        %vm343 = vcmp.ge.s32.totalorder %v330, 4
        %v344 = vsel %vm343, %v342, 0.0
        %v345 = vadd.f32 %v340, %v344
        %346 = vrot.lane.b32.xlu0 %v345, 8
        %v347 = vpop.permute.xlu0 %346
        %vm348 = vcmp.ge.s32.totalorder %v330, 8
        %v349 = vsel %vm348, %v347, 0.0
        %v350 = vadd.f32 %v345, %v349
        %351 = vrot.lane.b32.xlu0 %v350, 16
        %v352 = vpop.permute.xlu0 %351
        %vm353 = vcmp.ge.s32.totalorder %v330, 16
        %v354 = vsel %vm353, %v352, 0.0
        %v355 = vadd.f32 %v350, %v354
        %356 = vrot.lane.b32.xlu0 %v355, 32
        %v357 = vpop.permute.xlu0 %356
        %vm358 = vcmp.ge.s32.totalorder %v330, 32
        %v359 = vsel %vm358, %v357, 0.0
        %v360 = vadd.f32 %v355, %v359
        %361 = vrot.lane.b32.xlu0 %v360, 64
        %v362 = vpop.permute.xlu0 %361
        %vm363 = vcmp.ge.s32.totalorder %v330, 64
        %v364 = vsel %vm363, %v362, 0.0
        %v365 = vadd.f32 %v360, %v364
        %v366 = vld [vmem:[#allocation2] sm:$0x3]
        %368 = vset.pattern.permute.xlu0 0
        %369 = vperm.xlu0 %368, %v366
        %v370 = vpop.permute.xlu0 %369
        %v372 = vadd.f32 %v365, %v370
        %374 = vrot.lane.b32.xlu0 %v372, 1
        %v375 = vpop.permute.xlu0 %374
        %vm377 = vcmask 1024
        %378 = vst.msk [vmem:[#allocation2] sm:$0x3] %vm377, %v375
        %v379 = vld [vmem:[%s246] sm:$0x1]
        %v380 = vmul.f32 %v372, %v379
        %v381 = vmul.f32 %v380, 2.0
        %v382 = vmul.f32 %v381, %v372
        %v384 = vrot.slane %v382, 7
        %v386 = vsub.f32 %v372, %v384
        %v388 = vlaneseq
        %v389 = vshrl.u32 %v388, 7
        %v390 = vsub.s32 0, %v389
        %v391 = vrot.slane %v379, %v390
        %v393 = vmul.f32 %v386, %v391
        %v394 = vmul.f32 %v380, %v380
        %v396 = vrot.slane %v394, 7
        %v398 = vadd.f32 %v393, %v396
        %v399 = vmax.f32 %v398, 0.0
        %v400 = vadd.f32 %v399, 1e-08
        %v401 = vrsqrt.pop %v400
        %v402 = vld [vmem:[%s1] sm:$0xff]
        %v403 = vld [vmem:[%s1 + $0x8] sm:$0xff]
        %v404 = vld [vmem:[%s1 + $0x10] sm:$0xff]
        %v405 = vld [vmem:[%s1 + $0x18] sm:$0xff]
        %v406 = vld [vmem:[%s1 + $0x20] sm:$0xff]
        %v407 = vld [vmem:[%s1 + $0x28] sm:$0xff]
        %v408 = vld [vmem:[%s1 + $0x30] sm:$0xff]
        %v409 = vld [vmem:[%s1 + $0x38] sm:$0xff]
        %v410 = vld [vmem:[%s1 + $0x40] sm:$0xff]
        %v411 = vld [vmem:[%s1 + $0x48] sm:$0xff]
        %v412 = vld [vmem:[%s1 + $0x50] sm:$0xff]
        %v413 = vld [vmem:[%s1 + $0x58] sm:$0xff]
        %v414 = vld [vmem:[%s1 + $0x60] sm:$0xff]
        %v415 = vld [vmem:[%s1 + $0x68] sm:$0xff]
        %v416 = vld [vmem:[%s1 + $0x70] sm:$0xff]
        %v417 = vld [vmem:[%s1 + $0x78] sm:$0xff]
        %v418 = vld [vmem:[%s2] sm:$0xff]
        %v419 = vld [vmem:[%s2 + $0x8] sm:$0xff]
        %v420 = vld [vmem:[%s2 + $0x10] sm:$0xff]
        %v421 = vld [vmem:[%s2 + $0x18] sm:$0xff]
        %v422 = vld [vmem:[%s2 + $0x20] sm:$0xff]
        %v423 = vld [vmem:[%s2 + $0x28] sm:$0xff]
        %v424 = vld [vmem:[%s2 + $0x30] sm:$0xff]
        %v425 = vld [vmem:[%s2 + $0x38] sm:$0xff]
        %v426 = vld [vmem:[%s2 + $0x40] sm:$0xff]
        %v427 = vld [vmem:[%s2 + $0x48] sm:$0xff]
        %v428 = vld [vmem:[%s2 + $0x50] sm:$0xff]
        %v429 = vld [vmem:[%s2 + $0x58] sm:$0xff]
        %v430 = vld [vmem:[%s2 + $0x60] sm:$0xff]
        %v431 = vld [vmem:[%s2 + $0x68] sm:$0xff]
        %v432 = vld [vmem:[%s2 + $0x70] sm:$0xff]
        %v433 = vld [vmem:[%s2 + $0x78] sm:$0xff]
        %v434 = vlaneseq
        %v435 = vshrl.u32 %v434, 7
        %v436 = vsub.s32 0, %v435
        %v437 = vrot.slane %v380, %v436
        %v438 = vsub.f32 %v253, %v437
        %v439 = vsub.f32 %v254, %v437
        %v440 = vsub.f32 %v255, %v437
        %v441 = vsub.f32 %v256, %v437
        %v442 = vsub.f32 %v257, %v437
        %v443 = vsub.f32 %v258, %v437
        %v444 = vsub.f32 %v259, %v437
        %v445 = vsub.f32 %v260, %v437
        %v446 = vsub.f32 %v261, %v437
        %v447 = vsub.f32 %v262, %v437
        %v448 = vsub.f32 %v263, %v437
        %v449 = vsub.f32 %v264, %v437
        %v450 = vsub.f32 %v265, %v437
        %v451 = vsub.f32 %v266, %v437
        %v452 = vsub.f32 %v267, %v437
        %v453 = vsub.f32 %v268, %v437
        %v454 = vlaneseq
        %v455 = vshrl.u32 %v454, 7
        %v456 = vsub.s32 1, %v455
        %v457 = vrot.slane %v401, %v456
        %v458 = vmul.f32 %v438, %v457
        %v459 = vmul.f32 %v439, %v457
        %v460 = vmul.f32 %v440, %v457
        %v461 = vmul.f32 %v441, %v457
        %v462 = vmul.f32 %v442, %v457
        %v463 = vmul.f32 %v443, %v457
        %v464 = vmul.f32 %v444, %v457
        %v465 = vmul.f32 %v445, %v457
        %v466 = vmul.f32 %v446, %v457
        %v467 = vmul.f32 %v447, %v457
        %v468 = vmul.f32 %v448, %v457
        %v469 = vmul.f32 %v449, %v457
        %v470 = vmul.f32 %v450, %v457
        %v471 = vmul.f32 %v451, %v457
        %v472 = vmul.f32 %v452, %v457
        %v473 = vmul.f32 %v453, %v457
        %475 = vset.pattern.permute.xlu0 0
        %476 = vperm.xlu0 %475, %v402
        %v477 = vpop.permute.xlu0 %476
        %480 = vset.pattern.permute.xlu0 0
        %481 = vperm.xlu0 %480, %v403
        %v482 = vpop.permute.xlu0 %481
        %485 = vset.pattern.permute.xlu0 0
        %486 = vperm.xlu0 %485, %v404
        %v487 = vpop.permute.xlu0 %486
        %490 = vset.pattern.permute.xlu0 0
        %491 = vperm.xlu0 %490, %v405
        %v492 = vpop.permute.xlu0 %491
        %495 = vset.pattern.permute.xlu0 0
        %496 = vperm.xlu0 %495, %v406
        %v497 = vpop.permute.xlu0 %496
        %500 = vset.pattern.permute.xlu0 0
        %501 = vperm.xlu0 %500, %v407
        %v502 = vpop.permute.xlu0 %501
        %505 = vset.pattern.permute.xlu0 0
        %506 = vperm.xlu0 %505, %v408
        %v507 = vpop.permute.xlu0 %506
        %510 = vset.pattern.permute.xlu0 0
        %511 = vperm.xlu0 %510, %v409
        %v512 = vpop.permute.xlu0 %511
        %515 = vset.pattern.permute.xlu0 0
        %516 = vperm.xlu0 %515, %v410
        %v517 = vpop.permute.xlu0 %516
        %520 = vset.pattern.permute.xlu0 0
        %521 = vperm.xlu0 %520, %v411
        %v522 = vpop.permute.xlu0 %521
        %525 = vset.pattern.permute.xlu0 0
        %526 = vperm.xlu0 %525, %v412
        %v527 = vpop.permute.xlu0 %526
        %530 = vset.pattern.permute.xlu0 0
        %531 = vperm.xlu0 %530, %v413
        %v532 = vpop.permute.xlu0 %531
        %535 = vset.pattern.permute.xlu0 0
        %536 = vperm.xlu0 %535, %v414
        %v537 = vpop.permute.xlu0 %536
        %540 = vset.pattern.permute.xlu0 0
        %541 = vperm.xlu0 %540, %v415
        %v542 = vpop.permute.xlu0 %541
        %545 = vset.pattern.permute.xlu0 0
        %546 = vperm.xlu0 %545, %v416
        %v547 = vpop.permute.xlu0 %546
        %550 = vset.pattern.permute.xlu0 0
        %551 = vperm.xlu0 %550, %v417
        %v552 = vpop.permute.xlu0 %551
        %v554 = vmul.f32 %v458, %v477
        %v555 = vmul.f32 %v459, %v482
        %v556 = vmul.f32 %v460, %v487
        %v557 = vmul.f32 %v461, %v492
        %v558 = vmul.f32 %v462, %v497
        %v559 = vmul.f32 %v463, %v502
        %v560 = vmul.f32 %v464, %v507
        %v561 = vmul.f32 %v465, %v512
        %v562 = vmul.f32 %v466, %v517
        %v563 = vmul.f32 %v467, %v522
        %v564 = vmul.f32 %v468, %v527
        %v565 = vmul.f32 %v469, %v532
        %v566 = vmul.f32 %v470, %v537
        %v567 = vmul.f32 %v471, %v542
        %v568 = vmul.f32 %v472, %v547
        %v569 = vmul.f32 %v473, %v552
        %571 = vset.pattern.permute.xlu0 0
        %572 = vperm.xlu0 %571, %v418
        %v573 = vpop.permute.xlu0 %572
        %576 = vset.pattern.permute.xlu0 0
        %577 = vperm.xlu0 %576, %v419
        %v578 = vpop.permute.xlu0 %577
        %581 = vset.pattern.permute.xlu0 0
        %582 = vperm.xlu0 %581, %v420
        %v583 = vpop.permute.xlu0 %582
        %586 = vset.pattern.permute.xlu0 0
        %587 = vperm.xlu0 %586, %v421
        %v588 = vpop.permute.xlu0 %587
        %591 = vset.pattern.permute.xlu0 0
        %592 = vperm.xlu0 %591, %v422
        %v593 = vpop.permute.xlu0 %592
        %596 = vset.pattern.permute.xlu0 0
        %597 = vperm.xlu0 %596, %v423
        %v598 = vpop.permute.xlu0 %597
        %601 = vset.pattern.permute.xlu0 0
        %602 = vperm.xlu0 %601, %v424
        %v603 = vpop.permute.xlu0 %602
        %606 = vset.pattern.permute.xlu0 0
        %607 = vperm.xlu0 %606, %v425
        %v608 = vpop.permute.xlu0 %607
        %611 = vset.pattern.permute.xlu0 0
        %612 = vperm.xlu0 %611, %v426
        %v613 = vpop.permute.xlu0 %612
        %616 = vset.pattern.permute.xlu0 0
        %617 = vperm.xlu0 %616, %v427
        %v618 = vpop.permute.xlu0 %617
        %621 = vset.pattern.permute.xlu0 0
        %622 = vperm.xlu0 %621, %v428
        %v623 = vpop.permute.xlu0 %622
        %626 = vset.pattern.permute.xlu0 0
        %627 = vperm.xlu0 %626, %v429
        %v628 = vpop.permute.xlu0 %627
        %631 = vset.pattern.permute.xlu0 0
        %632 = vperm.xlu0 %631, %v430
        %v633 = vpop.permute.xlu0 %632
        %636 = vset.pattern.permute.xlu0 0
        %637 = vperm.xlu0 %636, %v431
        %v638 = vpop.permute.xlu0 %637
        %641 = vset.pattern.permute.xlu0 0
        %642 = vperm.xlu0 %641, %v432
        %v643 = vpop.permute.xlu0 %642
        %646 = vset.pattern.permute.xlu0 0
        %647 = vperm.xlu0 %646, %v433
        %v648 = vpop.permute.xlu0 %647
        %v650 = vadd.f32 %v554, %v573
        %v651 = vadd.f32 %v555, %v578
        %v652 = vadd.f32 %v556, %v583
        %v653 = vadd.f32 %v557, %v588
        %v654 = vadd.f32 %v558, %v593
        %v655 = vadd.f32 %v559, %v598
        %v656 = vadd.f32 %v560, %v603
        %v657 = vadd.f32 %v561, %v608
        %v658 = vadd.f32 %v562, %v613
        %v659 = vadd.f32 %v563, %v618
        %v660 = vadd.f32 %v564, %v623
        %v661 = vadd.f32 %v565, %v628
        %v662 = vadd.f32 %v566, %v633
        %v663 = vadd.f32 %v567, %v638
        %v664 = vadd.f32 %v568, %v643
        %v665 = vadd.f32 %v569, %v648
        %666 = vst [vmem:[%s243] sm:$0xff] %v650
        %667 = vst [vmem:[%s243 + $0x8] sm:$0xff] %v651
        %668 = vst [vmem:[%s243 + $0x10] sm:$0xff] %v652
        %669 = vst [vmem:[%s243 + $0x18] sm:$0xff] %v653
        %670 = vst [vmem:[%s243 + $0x20] sm:$0xff] %v654
        %671 = vst [vmem:[%s243 + $0x28] sm:$0xff] %v655
        %672 = vst [vmem:[%s243 + $0x30] sm:$0xff] %v656
        %673 = vst [vmem:[%s243 + $0x38] sm:$0xff] %v657
        %674 = vst [vmem:[%s243 + $0x40] sm:$0xff] %v658
        %675 = vst [vmem:[%s243 + $0x48] sm:$0xff] %v659
        %676 = vst [vmem:[%s243 + $0x50] sm:$0xff] %v660
        %677 = vst [vmem:[%s243 + $0x58] sm:$0xff] %v661
        %678 = vst [vmem:[%s243 + $0x60] sm:$0xff] %v662
        %679 = vst [vmem:[%s243 + $0x68] sm:$0xff] %v663
        %680 = vst [vmem:[%s243 + $0x70] sm:$0xff] %v664
        %681 = vst [vmem:[%s243 + $0x78] sm:$0xff] %v665
        %s682 = sand.u32 %s139, 1
        %s683 = scalar_lea.sflag [#allocation5], %s682
        %s684 = sand.u32 %s139, 1
        %s685 = smul.addr %s684, 128
        %s686 = scalar_lea.vmem [#allocation6], %s685
        // Predicated region
        $region45: #{tpu_custom_call.1} parent=35 // pred_check
          %p687 = pneg %p149
        $region46: #{tpu_custom_call.1} parent=35 // pred_check_branch
          %689 = sbr.rel (%p687) target = $region48
        $region47: #{tpu_custom_call.1} parent=35 // pred_region
          %s691 = ssub.s32 2048, 2048
          %692 = vsyncadd %s683, %s691
          %s693 = smul.addr %s25, 64
          %s694 = sadd.s32 %s26, %s693
          %s695 = smul.addr %s694, 128
          %s696 = scalar_lea.hbm %s4, %s695
          %s697 = sshll.u32 %s686, 4
          %s698 = int_to_ptr.vmem [resolvable:$true] %s697
          %703 = dma.vmem_to_hbm [thread:$0]  %s698, 2048, %s696, %s683, 128, 512, 8
        $region48: #{tpu_custom_call.1} parent=35 // pred_fallthru
          _
      $region36: #{tpu_custom_call.1} parent=5 // pred_fallthru
        _
      %p704 = scmp.le.s32.totalorder 2, %s16
      // Predicated region
      $region49: #{tpu_custom_call.1} parent=5 // pred_check
        %p705 = pneg %p704
      $region50: #{tpu_custom_call.1} parent=5 // pred_check_branch
        %707 = sbr.rel (%p705) target = $region52
      $region51: #{tpu_custom_call.1} parent=5 // pred_region
        %s708 = ssub.s32 %s16, 2
        // Predicated region
        $region53: #{tpu_custom_call.1} parent=51 // pred_check
          %p709 = pneg %p155
        $region54: #{tpu_custom_call.1} parent=51 // pred_check_branch
          %711 = sbr.rel (%p709) target = $region56
        $region55: #{tpu_custom_call.1} parent=51 // pred_region
          %s712 = sand.u32 %s140, 1
          %s713 = scalar_lea.sflag [#allocation5], %s712
          %s714 = sand.u32 %s140, 1
          %s715 = smul.addr %s714, 128
          %s716 = scalar_lea.vmem [#allocation6], %s715
          %717 = dma.done %s713, 2048
        $region56: #{tpu_custom_call.1} parent=51 // pred_fallthru
          _
      $region52: #{tpu_custom_call.1} parent=5 // pred_fallthru
        _
    $region6: #{tpu_custom_call.1} parent=1 // loop_footer
      %s20 = sadd.s32 1, %s16
    $region7: #{tpu_custom_call.1} parent=1 // loop_footer_branch
      %15 = sbr.rel target = $region3
    $region8: #{tpu_custom_call.1} parent=1 // loop_exit
      _
    %718 = vsyncpa [#allocation4], 1
    %s719 = scalar_lea.sflag [#allocation4], 1
    %720 = vsyncpa %s719, 1
    %721 = vsyncpa [#allocation5], 1
    %s722 = scalar_lea.sflag [#allocation5], 1
    %723 = vsyncpa %s722, 1

</llo_original>
